<compile_context>
chip_gen: v6e
topology: v6e:2x2x1
jax: 0.10.0
libtpu: 0.0.40
codegen_flags: <defaults>
</compile_context>

<pallas_src>
import jax
import jax.numpy as jnp
from jax.experimental import pallas as pl
from jax.experimental.pallas import tpu as pltpu

S_DIM = 6
A_DIM = 4
HIDDEN = 30


def _round_up(n, m):
    return ((n + m - 1) // m) * m


def anet_kernel(x_ref, w1t_ref, b1_ref, w2t_ref, b2_ref, out_ref):
    # x_ref:   (TB, S_DIM)      -- batch tile, caller's batch-major layout
    # w1t_ref: (S_DIM, HIDDEN)  -- fc1.weight.T   (VMEM-resident)
    # b1_ref:  (1, HIDDEN)      -- fc1.bias
    # w2t_ref: (HIDDEN, A_DIM)  -- out.weight.T
    # b2_ref:  (1, A_DIM)       -- out.bias
    # out_ref: (TB, A_DIM)
    h = jnp.dot(x_ref[...], w1t_ref[...], preferred_element_type=jnp.float32)
    h = jnp.maximum(h + b1_ref[...], 0.0)
    y = jnp.dot(h, w2t_ref[...], preferred_element_type=jnp.float32)
    y = y + b2_ref[...]
    out_ref[...] = (jnp.tanh(y) * 2.0).astype(out_ref.dtype)


def anet_forward(x, w1, b1, w2, b2, *, tb=8192):
    """Forward pass matching PyTorch ANet.

    x:  (B, S_DIM) f32
    w1: (HIDDEN, S_DIM), b1: (HIDDEN,)   -- PyTorch fc1.weight / fc1.bias layout
    w2: (A_DIM, HIDDEN), b2: (A_DIM,)    -- PyTorch out.weight / out.bias layout
    returns (B, A_DIM) f32
    """
    B = x.shape[0]
    # Batch tile: multiple of 8 sublanes, no larger than needed for this batch.
    TB = max(8, min(_round_up(tb, 8), _round_up(B, 8)))
    nb = pl.cdiv(B, TB)

    # Tiny parameter re-layouts (a few hundred bytes; negligible vs HBM traffic).
    w1t = w1.T                      # (S_DIM, HIDDEN)
    w2t = w2.T                      # (HIDDEN, A_DIM)
    b1r = b1.reshape(1, HIDDEN)
    b2r = b2.reshape(1, A_DIM)

    return pl.pallas_call(
        anet_kernel,
        out_shape=jax.ShapeDtypeStruct((B, A_DIM), jnp.float32),
        grid=(nb,),
        in_specs=[
            pl.BlockSpec((TB, S_DIM), lambda i: (i, 0)),        # stream batch tiles
            pl.BlockSpec((S_DIM, HIDDEN), lambda i: (0, 0)),    # resident params
            pl.BlockSpec((1, HIDDEN), lambda i: (0, 0)),
            pl.BlockSpec((HIDDEN, A_DIM), lambda i: (0, 0)),
            pl.BlockSpec((1, A_DIM), lambda i: (0, 0)),
        ],
        out_specs=pl.BlockSpec((TB, A_DIM), lambda i: (i, 0)),
        compiler_params=pltpu.CompilerParams(
            dimension_semantics=("parallel",),
            # Lane-padded (TB,128) f32 blocks, double-buffered in/out, plus
            # intermediates: raise above the 16/32 MiB scoped defaults, stay
            # under v7x's 64 MiB physical VMEM.
            vmem_limit_bytes=48 * 1024 * 1024,
        ),
    )(x, w1t, b1r, w2t, b2r)


def init_params(key):
    """Synthetic init matching the PyTorch shapes/layout.
    fc1.weight ~ N(0, 0.1), out.weight ~ N(0, 0.1); biases ~ U(+-1/sqrt(fan_in))."""
    k1, k2, k3, k4 = jax.random.split(key, 4)
    w1 = 0.1 * jax.random.normal(k1, (HIDDEN, S_DIM), dtype=jnp.float32)
    w2 = 0.1 * jax.random.normal(k2, (A_DIM, HIDDEN), dtype=jnp.float32)
    bound1 = 1.0 / (S_DIM ** 0.5)
    bound2 = 1.0 / (HIDDEN ** 0.5)
    b1 = jax.random.uniform(k3, (HIDDEN,), jnp.float32, -bound1, bound1)
    b2 = jax.random.uniform(k4, (A_DIM,), jnp.float32, -bound2, bound2)
    return w1, b1, w2, b2


def _reference(x, w1, b1, w2, b2):
    h = jnp.maximum(x @ w1.T + b1, 0.0)
    return jnp.tanh(h @ w2.T + b2) * 2.0


if __name__ == "__main__":
    key = jax.random.PRNGKey(0)
    kx, kp, kx2 = jax.random.split(key, 3)
    w1, b1, w2, b2 = init_params(kp)

    # Small demo batch (single grid step, block == full array on batch axis).
    batch = 8
    x = jax.random.normal(kx, (batch, S_DIM), dtype=jnp.float32)
    out = jax.block_until_ready(anet_forward(x, w1, b1, w2, b2))
    ref = _reference(x, w1, b1, w2, b2)
    assert out.shape == (batch, A_DIM)
    assert jnp.allclose(out, ref, atol=1e-4, rtol=1e-4)

    # Larger batch exercising the multi-step batch grid + ragged last tile
    # (1000 rows, TB=256 -> 4 grid steps, last tile only 232 valid rows).
    batch2 = 1000
    x2 = jax.random.normal(kx2, (batch2, S_DIM), dtype=jnp.float32)
    out2 = jax.block_until_ready(anet_forward(x2, w1, b1, w2, b2, tb=256))
    ref2 = _reference(x2, w1, b1, w2, b2)
    assert out2.shape == (batch2, A_DIM)
    assert jnp.allclose(out2, ref2, atol=1e-4, rtol=1e-4)

    print("KERNEL_OK")
</pallas_src>

<mosaic_0001>
module attributes {stable_mosaic.version = 11 : i64} {
  func.func @anet_kernel(%arg0: i32, %arg1: memref<8x6xf32, #tpu.memory_space<vmem>>, %arg2: memref<6x30xf32, #tpu.memory_space<vmem>>, %arg3: memref<1x30xf32, #tpu.memory_space<vmem>>, %arg4: memref<30x4xf32, #tpu.memory_space<vmem>>, %arg5: memref<1x4xf32, #tpu.memory_space<vmem>>, %arg6: memref<8x4xf32, #tpu.memory_space<vmem>>) attributes {dimension_semantics = [#tpu.dimension_semantics<parallel>], iteration_bounds = array<i64: 1>, scalar_prefetch = 0 : i64, scratch_operands = 0 : i64, tpu.core_type = #tpu.core_type<tc>, window_params = [{transform_indices = @transform_0, window_bounds = array<i64: 8, 6>}, {pipeline_mode = #tpu.pipeline_mode<synchronous>, transform_indices = @transform_1, window_bounds = array<i64: 6, 30>}, {pipeline_mode = #tpu.pipeline_mode<synchronous>, transform_indices = @transform_2, window_bounds = array<i64: 1, 30>}, {pipeline_mode = #tpu.pipeline_mode<synchronous>, transform_indices = @transform_3, window_bounds = array<i64: 30, 4>}, {pipeline_mode = #tpu.pipeline_mode<synchronous>, transform_indices = @transform_4, window_bounds = array<i64: 1, 4>}, {transform_indices = @transform_5, window_bounds = array<i64: 8, 4>}]} {
    %c0 = arith.constant 0 : index
    %c0_0 = arith.constant 0 : index
    %0 = vector.load %arg1[%c0, %c0_0] : memref<8x6xf32, #tpu.memory_space<vmem>>, vector<8x6xf32>
    %c0_1 = arith.constant 0 : index
    %c0_2 = arith.constant 0 : index
    %1 = vector.load %arg2[%c0_1, %c0_2] : memref<6x30xf32, #tpu.memory_space<vmem>>, vector<6x30xf32>
    %cst = arith.constant dense<0.000000e+00> : vector<8x30xf32>
    %2 = tpu.matmul %0, %1, %cst {dimension_numbers = #tpu.dot_dimension_numbers<[1], [0], [0], [1], [0, 0, 1, 1], [], []>} : vector<8x6xf32>, vector<6x30xf32>, vector<8x30xf32> -> vector<8x30xf32>
    %c0_3 = arith.constant 0 : index
    %c0_4 = arith.constant 0 : index
    %3 = vector.load %arg3[%c0_3, %c0_4] : memref<1x30xf32, #tpu.memory_space<vmem>>, vector<1x30xf32>
    %4 = vector.broadcast %3 : vector<1x30xf32> to vector<8x30xf32>
    %5 = arith.addf %2, %4 : vector<8x30xf32>
    %cst_5 = arith.constant 0.000000e+00 : f32
    %6 = vector.broadcast %cst_5 : f32 to vector<8x30xf32>
    %7 = arith.maximumf %5, %6 : vector<8x30xf32>
    %c0_6 = arith.constant 0 : index
    %c0_7 = arith.constant 0 : index
    %8 = vector.load %arg4[%c0_6, %c0_7] : memref<30x4xf32, #tpu.memory_space<vmem>>, vector<30x4xf32>
    %cst_8 = arith.constant dense<0.000000e+00> : vector<8x4xf32>
    %9 = tpu.matmul %7, %8, %cst_8 {dimension_numbers = #tpu.dot_dimension_numbers<[1], [0], [0], [1], [0, 0, 1, 1], [], []>} : vector<8x30xf32>, vector<30x4xf32>, vector<8x4xf32> -> vector<8x4xf32>
    %c0_9 = arith.constant 0 : index
    %c0_10 = arith.constant 0 : index
    %10 = vector.load %arg5[%c0_9, %c0_10] : memref<1x4xf32, #tpu.memory_space<vmem>>, vector<1x4xf32>
    %11 = vector.broadcast %10 : vector<1x4xf32> to vector<8x4xf32>
    %12 = arith.addf %9, %11 : vector<8x4xf32>
    %13 = math.tanh %12 : vector<8x4xf32>
    %cst_11 = arith.constant 2.000000e+00 : f32
    %14 = vector.broadcast %cst_11 : f32 to vector<8x4xf32>
    %15 = arith.mulf %13, %14 : vector<8x4xf32>
    %c0_12 = arith.constant 0 : index
    %c0_13 = arith.constant 0 : index
    %16 = vector.load %arg6[%c0_12, %c0_13] : memref<8x4xf32, #tpu.memory_space<vmem>>, vector<8x4xf32>
    tpu.vector_store %arg6[%c0_12, %c0_13], %15 {strides = array<i32>} : memref<8x4xf32, #tpu.memory_space<vmem>>, vector<8x4xf32>,
    return
  }
  func.func @transform_0(%arg0: i32) -> (i32, i32) {
    %c0_i32 = arith.constant 0 : i32
    %c0_i32_0 = arith.constant 0 : i32
    return %arg0, %c0_i32 : i32, i32
  }
  func.func @transform_1(%arg0: i32) -> (i32, i32) {
    %c0_i32 = arith.constant 0 : i32
    %c0_i32_0 = arith.constant 0 : i32
    %c0_i32_1 = arith.constant 0 : i32
    return %c0_i32, %c0_i32_0 : i32, i32
  }
  func.func @transform_2(%arg0: i32) -> (i32, i32) {
    %c0_i32 = arith.constant 0 : i32
    %c0_i32_0 = arith.constant 0 : i32
    %c0_i32_1 = arith.constant 0 : i32
    return %c0_i32, %c0_i32_0 : i32, i32
  }
  func.func @transform_3(%arg0: i32) -> (i32, i32) {
    %c0_i32 = arith.constant 0 : i32
    %c0_i32_0 = arith.constant 0 : i32
    %c0_i32_1 = arith.constant 0 : i32
    return %c0_i32, %c0_i32_0 : i32, i32
  }
  func.func @transform_4(%arg0: i32) -> (i32, i32) {
    %c0_i32 = arith.constant 0 : i32
    %c0_i32_0 = arith.constant 0 : i32
    %c0_i32_1 = arith.constant 0 : i32
    return %c0_i32, %c0_i32_0 : i32, i32
  }
  func.func @transform_5(%arg0: i32) -> (i32, i32) {
    %c0_i32 = arith.constant 0 : i32
    %c0_i32_0 = arith.constant 0 : i32
    return %arg0, %c0_i32 : i32, i32
  }
}

</mosaic_0001>

<llo_original>
// kernel: tpu_custom_call.1
$region0: #{tpu_custom_call.1}
  #allocation0 [shape = 'u32[]', space=smem, size = 0x4, offset = 0x4, fixed_abs, tag = 'smem constant byte address 0x4 - core index']
  #allocation1 [shape = 'u32[144,128]{1,0:T(1,128)}', space=vmem, size = 0x12000, scoped, tag = 'internal scratch']
  %s0 = inlined_call_operand.vmem [shape: f32[8,6], index: 0, kind: input, shape index: {}]
  %s1 = inlined_call_operand.vmem [shape: f32[6,30], index: 1, kind: input, shape index: {}]
  %s2 = inlined_call_operand.vmem [shape: f32[1,30], index: 2, kind: input, shape index: {}]
  %s3 = inlined_call_operand.vmem [shape: f32[30,4], index: 3, kind: input, shape index: {}]
  %s4 = inlined_call_operand.vmem [shape: f32[1,4], index: 4, kind: input, shape index: {}]
  %s5 = inlined_call_operand.vmem [shape: f32[8,4], index: 5, kind: output, shape index: {}]
  %s6 = sld [smem:[#allocation0]]
  $region30: #{tpu_custom_call.1} parent=0
    _
  %s8 = ssub.s32 1, %s6
  %s9 = scalar_select 0, %s8, %s6
  // Predicated region
  $region2: #{tpu_custom_call.1} parent=0 // pred_check
    _
  $region3: #{tpu_custom_call.1} parent=0 // pred_check_branch
    %11 = sbr.rel (0) target = $region5
  $region4: #{tpu_custom_call.1} parent=0 // pred_region
    _
  $region5: #{tpu_custom_call.1} parent=0 // pred_fallthru
    _
  // Predicated region
  $region6: #{tpu_custom_call.1} parent=0 // pred_check
    _
  $region7: #{tpu_custom_call.1} parent=0 // pred_check_branch
    %13 = sbr.rel (0) target = $region9
  $region8: #{tpu_custom_call.1} parent=0 // pred_region
    _
  $region9: #{tpu_custom_call.1} parent=0 // pred_fallthru
    _
  // Predicated region
  $region10: #{tpu_custom_call.1} parent=0 // pred_check
    _
  $region11: #{tpu_custom_call.1} parent=0 // pred_check_branch
    %15 = sbr.rel (0) target = $region13
  $region12: #{tpu_custom_call.1} parent=0 // pred_region
    _
  $region13: #{tpu_custom_call.1} parent=0 // pred_fallthru
    _
  // Predicated region
  $region14: #{tpu_custom_call.1} parent=0 // pred_check
    _
  $region15: #{tpu_custom_call.1} parent=0 // pred_check_branch
    %17 = sbr.rel (0) target = $region17
  $region16: #{tpu_custom_call.1} parent=0 // pred_region
    _
  $region17: #{tpu_custom_call.1} parent=0 // pred_fallthru
    _
  // Predicated region
  $region18: #{tpu_custom_call.1} parent=0 // pred_check
    _
  $region19: #{tpu_custom_call.1} parent=0 // pred_check_branch
    %19 = sbr.rel (0) target = $region21
  $region20: #{tpu_custom_call.1} parent=0 // pred_region
    _
  $region21: #{tpu_custom_call.1} parent=0 // pred_fallthru
    _
  %v20 = vld [vmem:[%s0] sm:$0xff]
  %v21 = vld [vmem:[%s1] sm:$0x3f]
  %v22 = vld [vmem:[%s2] sm:$0x1]
  %v24 = vlaneseq
  %v25 = vshrl.u32 %v24, 7
  %v26 = vsub.s32 0, %v25
  %v27 = vrot.slane %v22, %v26
  %vm29 = vcmask 48128
  %v31 = vsel %vm29, %v20, 0
  %vm33 = vcmask 1045504
  %v35 = vsel %vm33, %v21, 0
  %37 = vmatprep.subr.mxu0 0.0
  %38 = vmatpush1.msra.mxu0 0.0
  %39 = vmatprep.subr.mxu0 0.0
  %40 = vmatpush1.msra.mxu0 0.0
  %41 = vmatprep.subr.mxu0 0.0
  %42 = vmatpush1.msra.mxu0 0.0
  %43 = vmatprep.subr.mxu0 0.0
  %44 = vmatpush1.msra.mxu0 0.0
  %45 = vmatprep.subr.mxu0 0.0
  %46 = vmatpush1.msra.mxu0 0.0
  %47 = vmatprep.subr.mxu0 0.0
  %48 = vmatpush1.msra.mxu0 0.0
  %49 = vmatprep.subr.mxu0 0.0
  %50 = vmatpush1.msra.mxu0 0.0
  %51 = vmatprep.subr.mxu0 0.0
  %52 = vmatpush1.msra.mxu0 0.0
  %53 = vmatprep.subr.mxu0 0.0
  %54 = vmatpush1.msra.mxu0 0.0
  %55 = vmatprep.subr.mxu0 0.0
  %56 = vmatpush1.msra.mxu0 0.0
  %57 = vmatprep.subr.mxu0 0.0
  %58 = vmatpush1.msra.mxu0 0.0
  %59 = vmatprep.subr.mxu0 0.0
  %60 = vmatpush1.msra.mxu0 0.0
  %61 = vmatprep.subr.mxu0 0.0
  %62 = vmatpush1.msra.mxu0 0.0
  %63 = vmatprep.subr.mxu0 0.0
  %64 = vmatpush1.msra.mxu0 0.0
  %65 = vmatprep.subr.mxu0 0.0
  %66 = vmatpush1.msra.mxu0 0.0
  %67 = vmatprep.subr.mxu0 0.0
  %68 = vmatpush1.msra.mxu0 %v35
  %69 = vmatprep.subr.mxu0 0.0
  %70 = vmatpush2.msra.mxu0 0.0
  %71 = vmatprep.subr.mxu0 0.0
  %72 = vmatpush2.msra.mxu0 0.0
  %73 = vmatprep.subr.mxu0 0.0
  %74 = vmatpush2.msra.mxu0 0.0
  %75 = vmatprep.subr.mxu0 0.0
  %76 = vmatpush2.msra.mxu0 0.0
  %77 = vmatprep.subr.mxu0 0.0
  %78 = vmatpush2.msra.mxu0 0.0
  %79 = vmatprep.subr.mxu0 0.0
  %80 = vmatpush2.msra.mxu0 0.0
  %81 = vmatprep.subr.mxu0 0.0
  %82 = vmatpush2.msra.mxu0 0.0
  %83 = vmatprep.subr.mxu0 0.0
  %84 = vmatpush2.msra.mxu0 0.0
  %85 = vmatprep.subr.mxu0 0.0
  %86 = vmatpush2.msra.mxu0 0.0
  %87 = vmatprep.subr.mxu0 0.0
  %88 = vmatpush2.msra.mxu0 0.0
  %89 = vmatprep.subr.mxu0 0.0
  %90 = vmatpush2.msra.mxu0 0.0
  %91 = vmatprep.subr.mxu0 0.0
  %92 = vmatpush2.msra.mxu0 0.0
  %93 = vmatprep.subr.mxu0 0.0
  %94 = vmatpush2.msra.mxu0 0.0
  %95 = vmatprep.subr.mxu0 0.0
  %96 = vmatpush2.msra.mxu0 0.0
  %97 = vmatprep.subr.mxu0 0.0
  %98 = vmatpush2.msra.mxu0 0.0
  %99 = vmatprep.subr.mxu0 0.0
  %100 = vmatpush2.msra.mxu0 0.0
  %101 = vmatprep.mubr.f32.mxu0 0.0
  %102 = vmatmul.mubr.f32.gmra.mxu0 %v31
  %v103 = vpop.f32.mrf.mxu0
  %v104 = vadd.f32 %v27, %v103
  %v105 = vpop.f32.mrf.mxu0
  %106 = vdwg.mxu0
  %v107 = vmax.f32 %v104, 0.0
  %v108 = vld [vmem:[%s3] sm:$0xff]
  %v109 = vld [vmem:[%s3 + $0x8] sm:$0xff]
  %v110 = vld [vmem:[%s3 + $0x10] sm:$0xff]
  %v111 = vld [vmem:[%s3 + $0x18] sm:$0x3f]
  %v112 = vld [vmem:[%s4] sm:$0x1]
  %v114 = vlaneseq
  %v115 = vshrl.u32 %v114, 7
  %v116 = vsub.s32 0, %v115
  %v117 = vrot.slane %v112, %v116
  %vm119 = vcmask 244736
  %v121 = vsel %vm119, %v107, 0
  %v124 = vsel %vm33, %v111, 0
  %126 = vmatprep.subr.mxu0 0.0
  %127 = vmatpush1.msra.mxu0 0.0
  %128 = vmatprep.subr.mxu0 0.0
  %129 = vmatpush1.msra.mxu0 0.0
  %130 = vmatprep.subr.mxu0 0.0
  %131 = vmatpush1.msra.mxu0 0.0
  %132 = vmatprep.subr.mxu0 0.0
  %133 = vmatpush1.msra.mxu0 0.0
  %134 = vmatprep.subr.mxu0 0.0
  %135 = vmatpush1.msra.mxu0 0.0
  %136 = vmatprep.subr.mxu0 0.0
  %137 = vmatpush1.msra.mxu0 0.0
  %138 = vmatprep.subr.mxu0 0.0
  %139 = vmatpush1.msra.mxu0 0.0
  %140 = vmatprep.subr.mxu0 0.0
  %141 = vmatpush1.msra.mxu0 0.0
  %142 = vmatprep.subr.mxu0 0.0
  %143 = vmatpush1.msra.mxu0 0.0
  %144 = vmatprep.subr.mxu0 0.0
  %145 = vmatpush1.msra.mxu0 0.0
  %146 = vmatprep.subr.mxu0 0.0
  %147 = vmatpush1.msra.mxu0 0.0
  %148 = vmatprep.subr.mxu0 0.0
  %149 = vmatpush1.msra.mxu0 0.0
  %150 = vmatprep.subr.mxu0 0.0
  %151 = vmatpush1.msra.mxu0 %v124
  %152 = vmatprep.subr.mxu0 0.0
  %153 = vmatpush1.msra.mxu0 %v110
  %154 = vmatprep.subr.mxu0 0.0
  %155 = vmatpush1.msra.mxu0 %v109
  %156 = vmatprep.subr.mxu0 0.0
  %157 = vmatpush1.msra.mxu0 %v108
  %158 = vmatprep.subr.mxu0 0.0
  %159 = vmatpush2.msra.mxu0 0.0
  %160 = vmatprep.subr.mxu0 0.0
  %161 = vmatpush2.msra.mxu0 0.0
  %162 = vmatprep.subr.mxu0 0.0
  %163 = vmatpush2.msra.mxu0 0.0
  %164 = vmatprep.subr.mxu0 0.0
  %165 = vmatpush2.msra.mxu0 0.0
  %166 = vmatprep.subr.mxu0 0.0
  %167 = vmatpush2.msra.mxu0 0.0
  %168 = vmatprep.subr.mxu0 0.0
  %169 = vmatpush2.msra.mxu0 0.0
  %170 = vmatprep.subr.mxu0 0.0
  %171 = vmatpush2.msra.mxu0 0.0
  %172 = vmatprep.subr.mxu0 0.0
  %173 = vmatpush2.msra.mxu0 0.0
  %174 = vmatprep.subr.mxu0 0.0
  %175 = vmatpush2.msra.mxu0 0.0
  %176 = vmatprep.subr.mxu0 0.0
  %177 = vmatpush2.msra.mxu0 0.0
  %178 = vmatprep.subr.mxu0 0.0
  %179 = vmatpush2.msra.mxu0 0.0
  %180 = vmatprep.subr.mxu0 0.0
  %181 = vmatpush2.msra.mxu0 0.0
  %182 = vmatprep.subr.mxu0 0.0
  %183 = vmatpush2.msra.mxu0 0.0
  %184 = vmatprep.subr.mxu0 0.0
  %185 = vmatpush2.msra.mxu0 0.0
  %186 = vmatprep.subr.mxu0 0.0
  %187 = vmatpush2.msra.mxu0 0.0
  %188 = vmatprep.subr.mxu0 0.0
  %189 = vmatpush2.msra.mxu0 0.0
  %190 = vmatprep.mubr.f32.mxu0 0.0
  %191 = vmatmul.mubr.f32.gmra.mxu0 %v121
  %v192 = vpop.f32.mrf.mxu0
  %v193 = vadd.f32 %v117, %v192
  %v194 = vpop.f32.mrf.mxu0
  %195 = vdwg.mxu0
  %v196 = vtanh.pop %v193
  %v197 = vmul.f32 %v196, 2.0
  %vm198 = vcmask 31744
  %199 = vst.msk [vmem:[%s5] sm:$0xff] %vm198, %v197
  // Predicated region
  $region22: #{tpu_custom_call.1} parent=0 // pred_check
    _
  $region23: #{tpu_custom_call.1} parent=0 // pred_check_branch
    %201 = sbr.rel (0) target = $region25
  $region24: #{tpu_custom_call.1} parent=0 // pred_region
    _
  $region25: #{tpu_custom_call.1} parent=0 // pred_fallthru
    _
  // Predicated region
  $region26: #{tpu_custom_call.1} parent=0 // pred_check
    _
  $region27: #{tpu_custom_call.1} parent=0 // pred_check_branch
    %203 = sbr.rel (0) target = $region29
  $region28: #{tpu_custom_call.1} parent=0 // pred_region
    _
  $region29: #{tpu_custom_call.1} parent=0 // pred_fallthru
    _

</llo_original>
